<compile_context>
chip_gen: v6e
topology: v6e:2x2x1
jax: 0.10.0
libtpu: 0.0.40
codegen_flags: <defaults>
</compile_context>

<pallas_src>
import jax
import jax.numpy as jnp
from jax.experimental import pallas as pl
from jax.experimental.pallas import tpu as pltpu


LANE = 128        # TPU lane width
MAX_TB = 2048     # max batch-lanes per grid step (working set stays << VMEM)


def _round_up(n, m):
    return ((n + m - 1) // m) * m


def _cdiv(a, b):
    return -(-a // b)


def _choose_tiling(batch):
    """Pick (TB, B_pad): lane-multiple tiles, >=2 even grid steps when possible."""
    b_lane = _round_up(max(batch, 1), LANE)
    n_steps = max(_cdiv(b_lane, MAX_TB), 1)
    if b_lane >= 2 * LANE:
        n_steps = max(n_steps, 2)
        if n_steps % 2:            # even step count -> balanced across 2 TCs (v7x)
            n_steps += 1
    tb = _round_up(_cdiv(b_lane, n_steps), LANE)
    return tb, tb * n_steps


# ----------------------------------------------------------------------------
# Kernel: feature MLP + fused value/advantage streams + (pre-folded) dueling
# aggregation, all in feature-major layout.  One batch-lane tile per grid
# step; weights VMEM-resident via constant index_maps.
# ----------------------------------------------------------------------------
def dueling_dqn_kernel(
    xT_ref,                       # (S, TB)        state, feature-major
    w0_ref, b0_ref,               # (H0, S), (H0, 1)
    w1_ref, b1_ref,               # (H1, H0), (H1, 1)
    wva_ref, bva_ref,             # (2*HV, H1), (2*HV, 1)   fused value|advantage fc
    wout_ref, bout_ref,           # (A_sub, 2*HV), (A_sub, 1) fused output + dueling fold
    qT_ref,                       # (A_sub, TB)
):
    xT = xT_ref[...]

    h = jnp.dot(w0_ref[...], xT, preferred_element_type=jnp.float32) + b0_ref[...]
    h = jnp.maximum(h, 0.0)                                   # (H0, TB)
    h = jnp.dot(w1_ref[...], h, preferred_element_type=jnp.float32) + b1_ref[...]
    h = jnp.maximum(h, 0.0)                                   # (H1, TB)

    # fused [value_fc | advantage_fc] + ReLU
    hva = jnp.dot(wva_ref[...], h, preferred_element_type=jnp.float32) + bva_ref[...]
    hva = jnp.maximum(hva, 0.0)                               # (2*HV, TB)

    # fused [value_output broadcast | advantage_output mean-centered] in one matmul
    q = jnp.dot(wout_ref[...], hva, preferred_element_type=jnp.float32) + bout_ref[...]
    qT_ref[...] = q.astype(qT_ref.dtype)                      # (A_sub, TB) lane-dense


# ----------------------------------------------------------------------------
# One-time weight fusion (hoisted out of the forward path).
# Converts (in, out) weights to feature-major (out, in), fuses the two stream
# fc's, folds the dueling mean into the output weights, pads action rows to a
# sublane multiple.
# ----------------------------------------------------------------------------
def fuse_params(p, action_size):
    w0 = p["w0"].T                                            # (H0, S)
    b0 = p["b0"].T                                            # (H0, 1)
    w1 = p["w1"].T                                            # (H1, H0)
    b1 = p["b1"].T                                            # (H1, 1)

    # Fused first-stage stream weights (rows: [value | advantage]).
    w_va = jnp.concatenate([p["wv1"].T, p["wa1"].T], axis=0)  # (2*HV, H1)
    b_va = jnp.concatenate([p["bv1"].T, p["ba1"].T], axis=0)  # (2*HV, 1)

    # Fold the dueling mean into the advantage output weights:
    #   a - mean(a) == (wa2 - mean_rows(wa2)) @ relu(ha) + (ba2 - mean(ba2))
    wv2 = p["wv2"].T                                          # (1, HV)
    wa2 = p["wa2"].T                                          # (A, HV)
    bv2 = p["bv2"].T                                          # (1, 1)
    ba2 = p["ba2"].T                                          # (A, 1)
    wa2_c = wa2 - jnp.mean(wa2, axis=0, keepdims=True)
    ba2_c = ba2 - jnp.mean(ba2, axis=0, keepdims=True)

    # Broadcast the value head to every action row; whole final stage is one matmul.
    w_out = jnp.concatenate([jnp.tile(wv2, (action_size, 1)), wa2_c], axis=1)  # (A, 2*HV)
    b_out = bv2 + ba2_c                                                        # (A, 1)

    # Pad action rows (sublane dim) to a multiple of 8; padded Q rows are 0.
    a_sub = _round_up(action_size, 8)
    pad = a_sub - action_size
    w_out = jnp.pad(w_out, ((0, pad), (0, 0)))
    b_out = jnp.pad(b_out, ((0, pad), (0, 0)))

    return dict(w0=w0, b0=b0, w1=w1, b1=b1,
                w_va=w_va, b_va=b_va, w_out=w_out, b_out=b_out)


# ----------------------------------------------------------------------------
# Forward wrapper (jit this; fused params precomputed once).
# ----------------------------------------------------------------------------
def dueling_dqn_forward(x, fused, action_size):
    B, S = x.shape
    TB, B_pad = _choose_tiling(B)
    a_sub = fused["w_out"].shape[0]

    # Feature-major input: (S, B_pad), lane dim = batch (multiple of 128).
    xT = jnp.pad(x.astype(jnp.float32).T, ((0, 0), (0, B_pad - B)))

    def const_spec(arr):
        # Full-array block, constant index -> DMA'd once, VMEM-resident.
        return pl.BlockSpec(arr.shape, lambda i: (0, 0))

    grid = (B_pad // TB,)
    qT = pl.pallas_call(
        dueling_dqn_kernel,
        out_shape=jax.ShapeDtypeStruct((a_sub, B_pad), jnp.float32),
        grid=grid,
        in_specs=[
            pl.BlockSpec((S, TB), lambda i: (0, i)),          # batch-lane-tiled input
            const_spec(fused["w0"]), const_spec(fused["b0"]),
            const_spec(fused["w1"]), const_spec(fused["b1"]),
            const_spec(fused["w_va"]), const_spec(fused["b_va"]),
            const_spec(fused["w_out"]), const_spec(fused["b_out"]),
        ],
        out_specs=pl.BlockSpec((a_sub, TB), lambda i: (0, i)),  # lane-dense, no pad lanes
        compiler_params=pltpu.CompilerParams(
            dimension_semantics=("parallel",)),                  # v7x: 2 TCs split batch
    )(xT, fused["w0"], fused["b0"], fused["w1"], fused["b1"],
      fused["w_va"], fused["b_va"], fused["w_out"], fused["b_out"])

    return qT[:action_size, :B].T                              # back to (B, A)


# ----------------------------------------------------------------------------
# Deterministic parameter init (state_size=16, action_size=8, layers=[32,32,32],
# activation='ReLU', batch_norm=False, dropout=0.0).  Weights built directly
# in (in, out) layout; fuse_params converts to feature-major.
# ----------------------------------------------------------------------------
def init_params(key, state_size, action_size, layers):
    H0, H1, HV = layers[0], layers[1], layers[2]

    def linear(key, fan_in, fan_out):
        kw, kb = jax.random.split(key)
        bound = 1.0 / jnp.sqrt(jnp.float32(fan_in))
        w = jax.random.uniform(kw, (fan_in, fan_out), jnp.float32, -bound, bound)
        b = jax.random.uniform(kb, (1, fan_out), jnp.float32, -bound, bound)
        return w, b

    keys = jax.random.split(key, 6)
    w0, b0 = linear(keys[0], state_size, H0)      # feature fc0
    w1, b1 = linear(keys[1], H0, H1)              # feature fc1
    wv1, bv1 = linear(keys[2], H1, HV)            # value_fc
    wv2, bv2 = linear(keys[3], HV, 1)             # value_output
    wa1, ba1 = linear(keys[4], H1, HV)            # advantage_fc
    wa2, ba2 = linear(keys[5], HV, action_size)   # advantage_output
    return dict(w0=w0, b0=b0, w1=w1, b1=b1,
                wv1=wv1, bv1=bv1, wv2=wv2, bv2=bv2,
                wa1=wa1, ba1=ba1, wa2=wa2, ba2=ba2)


def reference_forward(x, p):
    """Plain-JAX reference mirroring the PyTorch DuelingDQNType1.forward."""
    h = jnp.maximum(x @ p["w0"] + p["b0"], 0.0)
    h = jnp.maximum(h @ p["w1"] + p["b1"], 0.0)
    v = jnp.maximum(h @ p["wv1"] + p["bv1"], 0.0) @ p["wv2"] + p["bv2"]
    a = jnp.maximum(h @ p["wa1"] + p["ba1"], 0.0) @ p["wa2"] + p["ba2"]
    return v + (a - a.mean(axis=1, keepdims=True))


if __name__ == "__main__":
    # TODO(synk): batch_norm / dropout branches of the PyTorch module are
    # disabled in this configuration (batch_norm=False, dropout=0.0) and are
    # not implemented in the kernel.
    state_size, action_size = 16, 8
    layers = [32, 32, 32]

    key = jax.random.PRNGKey(0)
    k_x, k_x2, k_p = jax.random.split(key, 3)
    params = init_params(k_p, state_size, action_size, layers)

    # One-time fused / feature-major weights (hoisted out of the forward path).
    fused = jax.tree_util.tree_map(jax.block_until_ready, fuse_params(params, action_size))
    forward = jax.jit(dueling_dqn_forward, static_argnums=(2,))

    # Small-batch path (single grid step).
    batch = 2
    x = jax.random.normal(k_x, (batch, state_size), jnp.float32)
    q = jax.block_until_ready(forward(x, fused, action_size))
    q_ref = reference_forward(x, params)
    assert q.shape == (batch, action_size)
    assert jnp.allclose(q, q_ref, atol=1e-4, rtol=1e-4), "mismatch vs reference (B=2)"

    # Multi-tile path (grid of 2 "parallel" steps, padded batch lanes).
    batch2 = 384
    x2 = jax.random.normal(k_x2, (batch2, state_size), jnp.float32)
    q2 = jax.block_until_ready(forward(x2, fused, action_size))
    q2_ref = reference_forward(x2, params)
    assert q2.shape == (batch2, action_size)
    assert jnp.allclose(q2, q2_ref, atol=1e-4, rtol=1e-4), "mismatch vs reference (B=384)"

    print("KERNEL_OK")
</pallas_src>

<mosaic_0001>
module attributes {stable_mosaic.version = 11 : i64} {
  func.func @dueling_dqn_kernel(%arg0: i32, %arg1: memref<16x128xf32, #tpu.memory_space<vmem>>, %arg2: memref<32x16xf32, #tpu.memory_space<vmem>>, %arg3: memref<32x1xf32, #tpu.memory_space<vmem>>, %arg4: memref<32x32xf32, #tpu.memory_space<vmem>>, %arg5: memref<32x1xf32, #tpu.memory_space<vmem>>, %arg6: memref<64x32xf32, #tpu.memory_space<vmem>>, %arg7: memref<64x1xf32, #tpu.memory_space<vmem>>, %arg8: memref<8x64xf32, #tpu.memory_space<vmem>>, %arg9: memref<8x1xf32, #tpu.memory_space<vmem>>, %arg10: memref<8x128xf32, #tpu.memory_space<vmem>>) attributes {dimension_semantics = [#tpu.dimension_semantics<parallel>], iteration_bounds = array<i64: 1>, scalar_prefetch = 0 : i64, scratch_operands = 0 : i64, tpu.core_type = #tpu.core_type<tc>, window_params = [{transform_indices = @transform_0, window_bounds = array<i64: 16, 128>}, {pipeline_mode = #tpu.pipeline_mode<synchronous>, transform_indices = @transform_1, window_bounds = array<i64: 32, 16>}, {pipeline_mode = #tpu.pipeline_mode<synchronous>, transform_indices = @transform_2, window_bounds = array<i64: 32, 1>}, {pipeline_mode = #tpu.pipeline_mode<synchronous>, transform_indices = @transform_3, window_bounds = array<i64: 32, 32>}, {pipeline_mode = #tpu.pipeline_mode<synchronous>, transform_indices = @transform_4, window_bounds = array<i64: 32, 1>}, {pipeline_mode = #tpu.pipeline_mode<synchronous>, transform_indices = @transform_5, window_bounds = array<i64: 64, 32>}, {pipeline_mode = #tpu.pipeline_mode<synchronous>, transform_indices = @transform_6, window_bounds = array<i64: 64, 1>}, {pipeline_mode = #tpu.pipeline_mode<synchronous>, transform_indices = @transform_7, window_bounds = array<i64: 8, 64>}, {pipeline_mode = #tpu.pipeline_mode<synchronous>, transform_indices = @transform_8, window_bounds = array<i64: 8, 1>}, {transform_indices = @transform_9, window_bounds = array<i64: 8, 128>}]} {
    %c0 = arith.constant 0 : index
    %c0_0 = arith.constant 0 : index
    %0 = vector.load %arg1[%c0, %c0_0] : memref<16x128xf32, #tpu.memory_space<vmem>>, vector<16x128xf32>
    %c0_1 = arith.constant 0 : index
    %c0_2 = arith.constant 0 : index
    %1 = vector.load %arg2[%c0_1, %c0_2] : memref<32x16xf32, #tpu.memory_space<vmem>>, vector<32x16xf32>
    %cst = arith.constant dense<0.000000e+00> : vector<32x128xf32>
    %2 = tpu.matmul %1, %0, %cst {dimension_numbers = #tpu.dot_dimension_numbers<[1], [0], [0], [1], [0, 0, 1, 1], [], []>} : vector<32x16xf32>, vector<16x128xf32>, vector<32x128xf32> -> vector<32x128xf32>
    %c0_3 = arith.constant 0 : index
    %c0_4 = arith.constant 0 : index
    %3 = vector.load %arg3[%c0_3, %c0_4] : memref<32x1xf32, #tpu.memory_space<vmem>>, vector<32x1xf32>
    %4 = vector.broadcast %3 : vector<32x1xf32> to vector<32x128xf32>
    %5 = arith.addf %2, %4 : vector<32x128xf32>
    %cst_5 = arith.constant 0.000000e+00 : f32
    %6 = vector.broadcast %cst_5 : f32 to vector<32x128xf32>
    %7 = arith.maximumf %5, %6 : vector<32x128xf32>
    %c0_6 = arith.constant 0 : index
    %c0_7 = arith.constant 0 : index
    %8 = vector.load %arg4[%c0_6, %c0_7] : memref<32x32xf32, #tpu.memory_space<vmem>>, vector<32x32xf32>
    %cst_8 = arith.constant dense<0.000000e+00> : vector<32x128xf32>
    %9 = tpu.matmul %8, %7, %cst_8 {dimension_numbers = #tpu.dot_dimension_numbers<[1], [0], [0], [1], [0, 0, 1, 1], [], []>} : vector<32x32xf32>, vector<32x128xf32>, vector<32x128xf32> -> vector<32x128xf32>
    %c0_9 = arith.constant 0 : index
    %c0_10 = arith.constant 0 : index
    %10 = vector.load %arg5[%c0_9, %c0_10] : memref<32x1xf32, #tpu.memory_space<vmem>>, vector<32x1xf32>
    %11 = vector.broadcast %10 : vector<32x1xf32> to vector<32x128xf32>
    %12 = arith.addf %9, %11 : vector<32x128xf32>
    %cst_11 = arith.constant 0.000000e+00 : f32
    %13 = vector.broadcast %cst_11 : f32 to vector<32x128xf32>
    %14 = arith.maximumf %12, %13 : vector<32x128xf32>
    %c0_12 = arith.constant 0 : index
    %c0_13 = arith.constant 0 : index
    %15 = vector.load %arg6[%c0_12, %c0_13] : memref<64x32xf32, #tpu.memory_space<vmem>>, vector<64x32xf32>
    %cst_14 = arith.constant dense<0.000000e+00> : vector<64x128xf32>
    %16 = tpu.matmul %15, %14, %cst_14 {dimension_numbers = #tpu.dot_dimension_numbers<[1], [0], [0], [1], [0, 0, 1, 1], [], []>} : vector<64x32xf32>, vector<32x128xf32>, vector<64x128xf32> -> vector<64x128xf32>
    %c0_15 = arith.constant 0 : index
    %c0_16 = arith.constant 0 : index
    %17 = vector.load %arg7[%c0_15, %c0_16] : memref<64x1xf32, #tpu.memory_space<vmem>>, vector<64x1xf32>
    %18 = vector.broadcast %17 : vector<64x1xf32> to vector<64x128xf32>
    %19 = arith.addf %16, %18 : vector<64x128xf32>
    %cst_17 = arith.constant 0.000000e+00 : f32
    %20 = vector.broadcast %cst_17 : f32 to vector<64x128xf32>
    %21 = arith.maximumf %19, %20 : vector<64x128xf32>
    %c0_18 = arith.constant 0 : index
    %c0_19 = arith.constant 0 : index
    %22 = vector.load %arg8[%c0_18, %c0_19] : memref<8x64xf32, #tpu.memory_space<vmem>>, vector<8x64xf32>
    %cst_20 = arith.constant dense<0.000000e+00> : vector<8x128xf32>
    %23 = tpu.matmul %22, %21, %cst_20 {dimension_numbers = #tpu.dot_dimension_numbers<[1], [0], [0], [1], [0, 0, 1, 1], [], []>} : vector<8x64xf32>, vector<64x128xf32>, vector<8x128xf32> -> vector<8x128xf32>
    %c0_21 = arith.constant 0 : index
    %c0_22 = arith.constant 0 : index
    %24 = vector.load %arg9[%c0_21, %c0_22] : memref<8x1xf32, #tpu.memory_space<vmem>>, vector<8x1xf32>
    %25 = vector.broadcast %24 : vector<8x1xf32> to vector<8x128xf32>
    %26 = arith.addf %23, %25 : vector<8x128xf32>
    %c0_23 = arith.constant 0 : index
    %c0_24 = arith.constant 0 : index
    %27 = vector.load %arg10[%c0_23, %c0_24] : memref<8x128xf32, #tpu.memory_space<vmem>>, vector<8x128xf32>
    tpu.vector_store %arg10[%c0_23, %c0_24], %26 {strides = array<i32>} : memref<8x128xf32, #tpu.memory_space<vmem>>, vector<8x128xf32>,
    return
  }
  func.func @transform_0(%arg0: i32) -> (i32, i32) {
    %c0_i32 = arith.constant 0 : i32
    %c0_i32_0 = arith.constant 0 : i32
    return %c0_i32, %arg0 : i32, i32
  }
  func.func @transform_1(%arg0: i32) -> (i32, i32) {
    %c0_i32 = arith.constant 0 : i32
    %c0_i32_0 = arith.constant 0 : i32
    %c0_i32_1 = arith.constant 0 : i32
    return %c0_i32, %c0_i32_0 : i32, i32
  }
  func.func @transform_2(%arg0: i32) -> (i32, i32) {
    %c0_i32 = arith.constant 0 : i32
    %c0_i32_0 = arith.constant 0 : i32
    %c0_i32_1 = arith.constant 0 : i32
    return %c0_i32, %c0_i32_0 : i32, i32
  }
  func.func @transform_3(%arg0: i32) -> (i32, i32) {
    %c0_i32 = arith.constant 0 : i32
    %c0_i32_0 = arith.constant 0 : i32
    %c0_i32_1 = arith.constant 0 : i32
    return %c0_i32, %c0_i32_0 : i32, i32
  }
  func.func @transform_4(%arg0: i32) -> (i32, i32) {
    %c0_i32 = arith.constant 0 : i32
    %c0_i32_0 = arith.constant 0 : i32
    %c0_i32_1 = arith.constant 0 : i32
    return %c0_i32, %c0_i32_0 : i32, i32
  }
  func.func @transform_5(%arg0: i32) -> (i32, i32) {
    %c0_i32 = arith.constant 0 : i32
    %c0_i32_0 = arith.constant 0 : i32
    %c0_i32_1 = arith.constant 0 : i32
    return %c0_i32, %c0_i32_0 : i32, i32
  }
  func.func @transform_6(%arg0: i32) -> (i32, i32) {
    %c0_i32 = arith.constant 0 : i32
    %c0_i32_0 = arith.constant 0 : i32
    %c0_i32_1 = arith.constant 0 : i32
    return %c0_i32, %c0_i32_0 : i32, i32
  }
  func.func @transform_7(%arg0: i32) -> (i32, i32) {
    %c0_i32 = arith.constant 0 : i32
    %c0_i32_0 = arith.constant 0 : i32
    %c0_i32_1 = arith.constant 0 : i32
    return %c0_i32, %c0_i32_0 : i32, i32
  }
  func.func @transform_8(%arg0: i32) -> (i32, i32) {
    %c0_i32 = arith.constant 0 : i32
    %c0_i32_0 = arith.constant 0 : i32
    %c0_i32_1 = arith.constant 0 : i32
    return %c0_i32, %c0_i32_0 : i32, i32
  }
  func.func @transform_9(%arg0: i32) -> (i32, i32) {
    %c0_i32 = arith.constant 0 : i32
    %c0_i32_0 = arith.constant 0 : i32
    return %c0_i32, %arg0 : i32, i32
  }
}

</mosaic_0001>

<llo_original>
// kernel: dueling_dqn_forward.1
$region0: #{dueling_dqn_forward.1}
  #allocation0 [shape = 'u32[]', space=smem, size = 0x4, offset = 0x4, fixed_abs, tag = 'smem constant byte address 0x4 - core index']
  #allocation1 [shape = 'u32[144,128]{1,0:T(1,128)}', space=vmem, size = 0x12000, scoped, tag = 'internal scratch']
  %s0 = inlined_call_operand.vmem [shape: f32[16,128], index: 0, kind: input, shape index: {}]
  %s1 = inlined_call_operand.vmem [shape: f32[32,16], index: 1, kind: input, shape index: {}]
  %s2 = inlined_call_operand.vmem [shape: f32[32,1], index: 2, kind: input, shape index: {}]
  %s3 = inlined_call_operand.vmem [shape: f32[32,32], index: 3, kind: input, shape index: {}]
  %s4 = inlined_call_operand.vmem [shape: f32[32,1], index: 4, kind: input, shape index: {}]
  %s5 = inlined_call_operand.vmem [shape: f32[64,32], index: 5, kind: input, shape index: {}]
  %s6 = inlined_call_operand.vmem [shape: f32[64,1], index: 6, kind: input, shape index: {}]
  %s7 = inlined_call_operand.vmem [shape: f32[8,64], index: 7, kind: input, shape index: {}]
  %s8 = inlined_call_operand.vmem [shape: f32[8,1], index: 8, kind: input, shape index: {}]
  %s9 = inlined_call_operand.vmem [shape: f32[8,128], index: 9, kind: output, shape index: {}]
  %s10 = sld [smem:[#allocation0]]
  $region46: #{dueling_dqn_forward.1} parent=0
    _
  %s12 = ssub.s32 1, %s10
  %s13 = scalar_select 0, %s12, %s10
  // Predicated region
  $region2: #{dueling_dqn_forward.1} parent=0 // pred_check
    _
  $region3: #{dueling_dqn_forward.1} parent=0 // pred_check_branch
    %15 = sbr.rel (0) target = $region5
  $region4: #{dueling_dqn_forward.1} parent=0 // pred_region
    _
  $region5: #{dueling_dqn_forward.1} parent=0 // pred_fallthru
    _
  // Predicated region
  $region6: #{dueling_dqn_forward.1} parent=0 // pred_check
    _
  $region7: #{dueling_dqn_forward.1} parent=0 // pred_check_branch
    %17 = sbr.rel (0) target = $region9
  $region8: #{dueling_dqn_forward.1} parent=0 // pred_region
    _
  $region9: #{dueling_dqn_forward.1} parent=0 // pred_fallthru
    _
  // Predicated region
  $region10: #{dueling_dqn_forward.1} parent=0 // pred_check
    _
  $region11: #{dueling_dqn_forward.1} parent=0 // pred_check_branch
    %19 = sbr.rel (0) target = $region13
  $region12: #{dueling_dqn_forward.1} parent=0 // pred_region
    _
  $region13: #{dueling_dqn_forward.1} parent=0 // pred_fallthru
    _
  // Predicated region
  $region14: #{dueling_dqn_forward.1} parent=0 // pred_check
    _
  $region15: #{dueling_dqn_forward.1} parent=0 // pred_check_branch
    %21 = sbr.rel (0) target = $region17
  $region16: #{dueling_dqn_forward.1} parent=0 // pred_region
    _
  $region17: #{dueling_dqn_forward.1} parent=0 // pred_fallthru
    _
  // Predicated region
  $region18: #{dueling_dqn_forward.1} parent=0 // pred_check
    _
  $region19: #{dueling_dqn_forward.1} parent=0 // pred_check_branch
    %23 = sbr.rel (0) target = $region21
  $region20: #{dueling_dqn_forward.1} parent=0 // pred_region
    _
  $region21: #{dueling_dqn_forward.1} parent=0 // pred_fallthru
    _
  // Predicated region
  $region22: #{dueling_dqn_forward.1} parent=0 // pred_check
    _
  $region23: #{dueling_dqn_forward.1} parent=0 // pred_check_branch
    %25 = sbr.rel (0) target = $region25
  $region24: #{dueling_dqn_forward.1} parent=0 // pred_region
    _
  $region25: #{dueling_dqn_forward.1} parent=0 // pred_fallthru
    _
  // Predicated region
  $region26: #{dueling_dqn_forward.1} parent=0 // pred_check
    _
  $region27: #{dueling_dqn_forward.1} parent=0 // pred_check_branch
    %27 = sbr.rel (0) target = $region29
  $region28: #{dueling_dqn_forward.1} parent=0 // pred_region
    _
  $region29: #{dueling_dqn_forward.1} parent=0 // pred_fallthru
    _
  // Predicated region
  $region30: #{dueling_dqn_forward.1} parent=0 // pred_check
    _
  $region31: #{dueling_dqn_forward.1} parent=0 // pred_check_branch
    %29 = sbr.rel (0) target = $region33
  $region32: #{dueling_dqn_forward.1} parent=0 // pred_region
    _
  $region33: #{dueling_dqn_forward.1} parent=0 // pred_fallthru
    _
  // Predicated region
  $region34: #{dueling_dqn_forward.1} parent=0 // pred_check
    _
  $region35: #{dueling_dqn_forward.1} parent=0 // pred_check_branch
    %31 = sbr.rel (0) target = $region37
  $region36: #{dueling_dqn_forward.1} parent=0 // pred_region
    _
  $region37: #{dueling_dqn_forward.1} parent=0 // pred_fallthru
    _
  %v32 = vld [vmem:[%s0] sm:$0xff]
  %v33 = vld [vmem:[%s0 + $0x8] sm:$0xff]
  %v34 = vld [vmem:[%s1] sm:$0xff]
  %v35 = vld [vmem:[%s1 + $0x8] sm:$0xff]
  %v36 = vld [vmem:[%s1 + $0x10] sm:$0xff]
  %v37 = vld [vmem:[%s1 + $0x18] sm:$0xff]
  %v38 = vld [vmem:[%s2] sm:$0xff]
  %v39 = vld [vmem:[%s2 + $0x8] sm:$0xff]
  %v40 = vld [vmem:[%s2 + $0x10] sm:$0xff]
  %v41 = vld [vmem:[%s2 + $0x18] sm:$0xff]
  %43 = vset.pattern.permute.xlu0 0
  %44 = vperm.xlu0 %43, %v38
  %v45 = vpop.permute.xlu0 %44
  %48 = vset.pattern.permute.xlu0 0
  %49 = vperm.xlu0 %48, %v39
  %v50 = vpop.permute.xlu0 %49
  %53 = vset.pattern.permute.xlu0 0
  %54 = vperm.xlu0 %53, %v40
  %v55 = vpop.permute.xlu0 %54
  %58 = vset.pattern.permute.xlu0 0
  %59 = vperm.xlu0 %58, %v41
  %v60 = vpop.permute.xlu0 %59
  %vm62 = vcmask 130048
  %v64 = vsel %vm62, %v34, 0
  %v67 = vsel %vm62, %v35, 0
  %v70 = vsel %vm62, %v36, 0
  %v73 = vsel %vm62, %v37, 0
  %75 = vmatprep.subr.mxu0 0.0
  %76 = vmatpush1.msra.mxu0 0.0
  %77 = vmatprep.subr.mxu0 0.0
  %78 = vmatpush1.msra.mxu0 0.0
  %79 = vmatprep.subr.mxu0 0.0
  %80 = vmatpush1.msra.mxu0 0.0
  %81 = vmatprep.subr.mxu0 0.0
  %82 = vmatpush1.msra.mxu0 0.0
  %83 = vmatprep.subr.mxu0 0.0
  %84 = vmatpush1.msra.mxu0 0.0
  %85 = vmatprep.subr.mxu0 0.0
  %86 = vmatpush1.msra.mxu0 0.0
  %87 = vmatprep.subr.mxu0 0.0
  %88 = vmatpush1.msra.mxu0 0.0
  %89 = vmatprep.subr.mxu0 0.0
  %90 = vmatpush1.msra.mxu0 0.0
  %91 = vmatprep.subr.mxu0 0.0
  %92 = vmatpush1.msra.mxu0 0.0
  %93 = vmatprep.subr.mxu0 0.0
  %94 = vmatpush1.msra.mxu0 0.0
  %95 = vmatprep.subr.mxu0 0.0
  %96 = vmatpush1.msra.mxu0 0.0
  %97 = vmatprep.subr.mxu0 0.0
  %98 = vmatpush1.msra.mxu0 0.0
  %99 = vmatprep.subr.mxu0 0.0
  %100 = vmatpush1.msra.mxu0 0.0
  %101 = vmatprep.subr.mxu0 0.0
  %102 = vmatpush1.msra.mxu0 0.0
  %103 = vmatprep.subr.mxu0 0.0
  %104 = vmatpush1.msra.mxu0 %v33
  %105 = vmatprep.subr.mxu0 0.0
  %106 = vmatpush1.msra.mxu0 %v32
  %107 = vmatprep.subr.mxu0 0.0
  %108 = vmatpush2.msra.mxu0 0.0
  %109 = vmatprep.subr.mxu0 0.0
  %110 = vmatpush2.msra.mxu0 0.0
  %111 = vmatprep.subr.mxu0 0.0
  %112 = vmatpush2.msra.mxu0 0.0
  %113 = vmatprep.subr.mxu0 0.0
  %114 = vmatpush2.msra.mxu0 0.0
  %115 = vmatprep.subr.mxu0 0.0
  %116 = vmatpush2.msra.mxu0 0.0
  %117 = vmatprep.subr.mxu0 0.0
  %118 = vmatpush2.msra.mxu0 0.0
  %119 = vmatprep.subr.mxu0 0.0
  %120 = vmatpush2.msra.mxu0 0.0
  %121 = vmatprep.subr.mxu0 0.0
  %122 = vmatpush2.msra.mxu0 0.0
  %123 = vmatprep.subr.mxu0 0.0
  %124 = vmatpush2.msra.mxu0 0.0
  %125 = vmatprep.subr.mxu0 0.0
  %126 = vmatpush2.msra.mxu0 0.0
  %127 = vmatprep.subr.mxu0 0.0
  %128 = vmatpush2.msra.mxu0 0.0
  %129 = vmatprep.subr.mxu0 0.0
  %130 = vmatpush2.msra.mxu0 0.0
  %131 = vmatprep.subr.mxu0 0.0
  %132 = vmatpush2.msra.mxu0 0.0
  %133 = vmatprep.subr.mxu0 0.0
  %134 = vmatpush2.msra.mxu0 0.0
  %135 = vmatprep.subr.mxu0 0.0
  %136 = vmatpush2.msra.mxu0 0.0
  %137 = vmatprep.subr.mxu0 0.0
  %138 = vmatpush2.msra.mxu0 0.0
  %139 = vmatprep.mubr.f32.mxu0 0.0
  %140 = vmatmul.mubr.f32.gmra.mxu0 %v64
  %v141 = vpop.f32.mrf.mxu0
  %v142 = vadd.f32 %v45, %v141
  %v143 = vpop.f32.mrf.mxu0
  %144 = vmatprep.mubr.f32.mxu0 0.0
  %145 = vmatmul.mubr.f32.gmra.mxu0 %v67
  %v146 = vpop.f32.mrf.mxu0
  %v147 = vadd.f32 %v50, %v146
  %v148 = vpop.f32.mrf.mxu0
  %149 = vmatprep.mubr.f32.mxu0 0.0
  %150 = vmatmul.mubr.f32.gmra.mxu0 %v70
  %v151 = vpop.f32.mrf.mxu0
  %v152 = vadd.f32 %v55, %v151
  %v153 = vpop.f32.mrf.mxu0
  %154 = vmatprep.mubr.f32.mxu0 0.0
  %155 = vmatmul.mubr.f32.gmra.mxu0 %v73
  %v156 = vpop.f32.mrf.mxu0
  %v157 = vadd.f32 %v60, %v156
  %v158 = vpop.f32.mrf.mxu0
  %159 = vdwg.mxu0
  %v160 = vmax.f32 %v142, 0.0
  %v161 = vmax.f32 %v147, 0.0
  %v162 = vmax.f32 %v152, 0.0
  %v163 = vmax.f32 %v157, 0.0
  %v164 = vld [vmem:[%s3] sm:$0xff]
  %v165 = vld [vmem:[%s3 + $0x8] sm:$0xff]
  %v166 = vld [vmem:[%s3 + $0x10] sm:$0xff]
  %v167 = vld [vmem:[%s3 + $0x18] sm:$0xff]
  %v168 = vld [vmem:[%s4] sm:$0xff]
  %v169 = vld [vmem:[%s4 + $0x8] sm:$0xff]
  %v170 = vld [vmem:[%s4 + $0x10] sm:$0xff]
  %v171 = vld [vmem:[%s4 + $0x18] sm:$0xff]
  %173 = vset.pattern.permute.xlu0 0
  %174 = vperm.xlu0 %173, %v168
  %v175 = vpop.permute.xlu0 %174
  %178 = vset.pattern.permute.xlu0 0
  %179 = vperm.xlu0 %178, %v169
  %v180 = vpop.permute.xlu0 %179
  %183 = vset.pattern.permute.xlu0 0
  %184 = vperm.xlu0 %183, %v170
  %v185 = vpop.permute.xlu0 %184
  %188 = vset.pattern.permute.xlu0 0
  %189 = vperm.xlu0 %188, %v171
  %v190 = vpop.permute.xlu0 %189
  %vm192 = vcmask 261120
  %v194 = vsel %vm192, %v164, 0
  %v197 = vsel %vm192, %v165, 0
  %v200 = vsel %vm192, %v166, 0
  %v203 = vsel %vm192, %v167, 0
  %205 = vmatprep.subr.mxu0 0.0
  %206 = vmatpush1.msra.mxu0 0.0
  %207 = vmatprep.subr.mxu0 0.0
  %208 = vmatpush1.msra.mxu0 0.0
  %209 = vmatprep.subr.mxu0 0.0
  %210 = vmatpush1.msra.mxu0 0.0
  %211 = vmatprep.subr.mxu0 0.0
  %212 = vmatpush1.msra.mxu0 0.0
  %213 = vmatprep.subr.mxu0 0.0
  %214 = vmatpush1.msra.mxu0 0.0
  %215 = vmatprep.subr.mxu0 0.0
  %216 = vmatpush1.msra.mxu0 0.0
  %217 = vmatprep.subr.mxu0 0.0
  %218 = vmatpush1.msra.mxu0 0.0
  %219 = vmatprep.subr.mxu0 0.0
  %220 = vmatpush1.msra.mxu0 0.0
  %221 = vmatprep.subr.mxu0 0.0
  %222 = vmatpush1.msra.mxu0 0.0
  %223 = vmatprep.subr.mxu0 0.0
  %224 = vmatpush1.msra.mxu0 0.0
  %225 = vmatprep.subr.mxu0 0.0
  %226 = vmatpush1.msra.mxu0 0.0
  %227 = vmatprep.subr.mxu0 0.0
  %228 = vmatpush1.msra.mxu0 0.0
  %229 = vmatprep.subr.mxu0 0.0
  %230 = vmatpush1.msra.mxu0 %v163
  %231 = vmatprep.subr.mxu0 0.0
  %232 = vmatpush1.msra.mxu0 %v162
  %233 = vmatprep.subr.mxu0 0.0
  %234 = vmatpush1.msra.mxu0 %v161
  %235 = vmatprep.subr.mxu0 0.0
  %236 = vmatpush1.msra.mxu0 %v160
  %237 = vmatprep.subr.mxu0 0.0
  %238 = vmatpush2.msra.mxu0 0.0
  %239 = vmatprep.subr.mxu0 0.0
  %240 = vmatpush2.msra.mxu0 0.0
  %241 = vmatprep.subr.mxu0 0.0
  %242 = vmatpush2.msra.mxu0 0.0
  %243 = vmatprep.subr.mxu0 0.0
  %244 = vmatpush2.msra.mxu0 0.0
  %245 = vmatprep.subr.mxu0 0.0
  %246 = vmatpush2.msra.mxu0 0.0
  %247 = vmatprep.subr.mxu0 0.0
  %248 = vmatpush2.msra.mxu0 0.0
  %249 = vmatprep.subr.mxu0 0.0
  %250 = vmatpush2.msra.mxu0 0.0
  %251 = vmatprep.subr.mxu0 0.0
  %252 = vmatpush2.msra.mxu0 0.0
  %253 = vmatprep.subr.mxu0 0.0
  %254 = vmatpush2.msra.mxu0 0.0
  %255 = vmatprep.subr.mxu0 0.0
  %256 = vmatpush2.msra.mxu0 0.0
  %257 = vmatprep.subr.mxu0 0.0
  %258 = vmatpush2.msra.mxu0 0.0
  %259 = vmatprep.subr.mxu0 0.0
  %260 = vmatpush2.msra.mxu0 0.0
  %261 = vmatprep.subr.mxu0 0.0
  %262 = vmatpush2.msra.mxu0 0.0
  %263 = vmatprep.subr.mxu0 0.0
  %264 = vmatpush2.msra.mxu0 0.0
  %265 = vmatprep.subr.mxu0 0.0
  %266 = vmatpush2.msra.mxu0 0.0
  %267 = vmatprep.subr.mxu0 0.0
  %268 = vmatpush2.msra.mxu0 0.0
  %269 = vmatprep.mubr.f32.mxu0 0.0
  %270 = vmatmul.mubr.f32.gmra.mxu0 %v194
  %v271 = vpop.f32.mrf.mxu0
  %v272 = vadd.f32 %v175, %v271
  %v273 = vpop.f32.mrf.mxu0
  %274 = vmatprep.mubr.f32.mxu0 0.0
  %275 = vmatmul.mubr.f32.gmra.mxu0 %v197
  %v276 = vpop.f32.mrf.mxu0
  %v277 = vadd.f32 %v180, %v276
  %v278 = vpop.f32.mrf.mxu0
  %279 = vmatprep.mubr.f32.mxu0 0.0
  %280 = vmatmul.mubr.f32.gmra.mxu0 %v200
  %v281 = vpop.f32.mrf.mxu0
  %v282 = vadd.f32 %v185, %v281
  %v283 = vpop.f32.mrf.mxu0
  %284 = vmatprep.mubr.f32.mxu0 0.0
  %285 = vmatmul.mubr.f32.gmra.mxu0 %v203
  %v286 = vpop.f32.mrf.mxu0
  %v287 = vadd.f32 %v190, %v286
  %v288 = vpop.f32.mrf.mxu0
  %289 = vdwg.mxu0
  %v290 = vmax.f32 %v272, 0.0
  %v291 = vmax.f32 %v277, 0.0
  %v292 = vmax.f32 %v282, 0.0
  %v293 = vmax.f32 %v287, 0.0
  %v294 = vld [vmem:[%s5] sm:$0xff]
  %v295 = vld [vmem:[%s5 + $0x8] sm:$0xff]
  %v296 = vld [vmem:[%s5 + $0x10] sm:$0xff]
  %v297 = vld [vmem:[%s5 + $0x18] sm:$0xff]
  %v298 = vld [vmem:[%s5 + $0x20] sm:$0xff]
  %v299 = vld [vmem:[%s5 + $0x28] sm:$0xff]
  %v300 = vld [vmem:[%s5 + $0x30] sm:$0xff]
  %v301 = vld [vmem:[%s5 + $0x38] sm:$0xff]
  %v302 = vld [vmem:[%s6] sm:$0xff]
  %v303 = vld [vmem:[%s6 + $0x8] sm:$0xff]
  %v304 = vld [vmem:[%s6 + $0x10] sm:$0xff]
  %v305 = vld [vmem:[%s6 + $0x18] sm:$0xff]
  %v306 = vld [vmem:[%s6 + $0x20] sm:$0xff]
  %v307 = vld [vmem:[%s6 + $0x28] sm:$0xff]
  %v308 = vld [vmem:[%s6 + $0x30] sm:$0xff]
  %v309 = vld [vmem:[%s6 + $0x38] sm:$0xff]
  %311 = vset.pattern.permute.xlu0 0
  %312 = vperm.xlu0 %311, %v302
  %v313 = vpop.permute.xlu0 %312
  %316 = vset.pattern.permute.xlu0 0
  %317 = vperm.xlu0 %316, %v303
  %v318 = vpop.permute.xlu0 %317
  %321 = vset.pattern.permute.xlu0 0
  %322 = vperm.xlu0 %321, %v304
  %v323 = vpop.permute.xlu0 %322
  %326 = vset.pattern.permute.xlu0 0
  %327 = vperm.xlu0 %326, %v305
  %v328 = vpop.permute.xlu0 %327
  %331 = vset.pattern.permute.xlu0 0
  %332 = vperm.xlu0 %331, %v306
  %v333 = vpop.permute.xlu0 %332
  %336 = vset.pattern.permute.xlu0 0
  %337 = vperm.xlu0 %336, %v307
  %v338 = vpop.permute.xlu0 %337
  %341 = vset.pattern.permute.xlu0 0
  %342 = vperm.xlu0 %341, %v308
  %v343 = vpop.permute.xlu0 %342
  %346 = vset.pattern.permute.xlu0 0
  %347 = vperm.xlu0 %346, %v309
  %v348 = vpop.permute.xlu0 %347
  %v351 = vsel %vm192, %v294, 0
  %v354 = vsel %vm192, %v295, 0
  %v357 = vsel %vm192, %v296, 0
  %v360 = vsel %vm192, %v297, 0
  %v363 = vsel %vm192, %v298, 0
  %v366 = vsel %vm192, %v299, 0
  %v369 = vsel %vm192, %v300, 0
  %v372 = vsel %vm192, %v301, 0
  %374 = vmatprep.subr.mxu0 0.0
  %375 = vmatpush1.msra.mxu0 0.0
  %376 = vmatprep.subr.mxu0 0.0
  %377 = vmatpush1.msra.mxu0 0.0
  %378 = vmatprep.subr.mxu0 0.0
  %379 = vmatpush1.msra.mxu0 0.0
  %380 = vmatprep.subr.mxu0 0.0
  %381 = vmatpush1.msra.mxu0 0.0
  %382 = vmatprep.subr.mxu0 0.0
  %383 = vmatpush1.msra.mxu0 0.0
  %384 = vmatprep.subr.mxu0 0.0
  %385 = vmatpush1.msra.mxu0 0.0
  %386 = vmatprep.subr.mxu0 0.0
  %387 = vmatpush1.msra.mxu0 0.0
  %388 = vmatprep.subr.mxu0 0.0
  %389 = vmatpush1.msra.mxu0 0.0
  %390 = vmatprep.subr.mxu0 0.0
  %391 = vmatpush1.msra.mxu0 0.0
  %392 = vmatprep.subr.mxu0 0.0
  %393 = vmatpush1.msra.mxu0 0.0
  %394 = vmatprep.subr.mxu0 0.0
  %395 = vmatpush1.msra.mxu0 0.0
  %396 = vmatprep.subr.mxu0 0.0
  %397 = vmatpush1.msra.mxu0 0.0
  %398 = vmatprep.subr.mxu0 0.0
  %399 = vmatpush1.msra.mxu0 %v293
  %400 = vmatprep.subr.mxu0 0.0
  %401 = vmatpush1.msra.mxu0 %v292
  %402 = vmatprep.subr.mxu0 0.0
  %403 = vmatpush1.msra.mxu0 %v291
  %404 = vmatprep.subr.mxu0 0.0
  %405 = vmatpush1.msra.mxu0 %v290
  %406 = vmatprep.subr.mxu0 0.0
  %407 = vmatpush2.msra.mxu0 0.0
  %408 = vmatprep.subr.mxu0 0.0
  %409 = vmatpush2.msra.mxu0 0.0
  %410 = vmatprep.subr.mxu0 0.0
  %411 = vmatpush2.msra.mxu0 0.0
  %412 = vmatprep.subr.mxu0 0.0
  %413 = vmatpush2.msra.mxu0 0.0
  %414 = vmatprep.subr.mxu0 0.0
  %415 = vmatpush2.msra.mxu0 0.0
  %416 = vmatprep.subr.mxu0 0.0
  %417 = vmatpush2.msra.mxu0 0.0
  %418 = vmatprep.subr.mxu0 0.0
  %419 = vmatpush2.msra.mxu0 0.0
  %420 = vmatprep.subr.mxu0 0.0
  %421 = vmatpush2.msra.mxu0 0.0
  %422 = vmatprep.subr.mxu0 0.0
  %423 = vmatpush2.msra.mxu0 0.0
  %424 = vmatprep.subr.mxu0 0.0
  %425 = vmatpush2.msra.mxu0 0.0
  %426 = vmatprep.subr.mxu0 0.0
  %427 = vmatpush2.msra.mxu0 0.0
  %428 = vmatprep.subr.mxu0 0.0
  %429 = vmatpush2.msra.mxu0 0.0
  %430 = vmatprep.subr.mxu0 0.0
  %431 = vmatpush2.msra.mxu0 0.0
  %432 = vmatprep.subr.mxu0 0.0
  %433 = vmatpush2.msra.mxu0 0.0
  %434 = vmatprep.subr.mxu0 0.0
  %435 = vmatpush2.msra.mxu0 0.0
  %436 = vmatprep.subr.mxu0 0.0
  %437 = vmatpush2.msra.mxu0 0.0
  %438 = vmatprep.mubr.f32.mxu0 0.0
  %439 = vmatmul.mubr.f32.gmra.mxu0 %v351
  %v440 = vpop.f32.mrf.mxu0
  %v441 = vadd.f32 %v313, %v440
  %v442 = vpop.f32.mrf.mxu0
  %443 = vmatprep.mubr.f32.mxu0 0.0
  %444 = vmatmul.mubr.f32.gmra.mxu0 %v354
  %v445 = vpop.f32.mrf.mxu0
  %v446 = vadd.f32 %v318, %v445
  %v447 = vpop.f32.mrf.mxu0
  %448 = vmatprep.mubr.f32.mxu0 0.0
  %449 = vmatmul.mubr.f32.gmra.mxu0 %v357
  %v450 = vpop.f32.mrf.mxu0
  %v451 = vadd.f32 %v323, %v450
  %v452 = vpop.f32.mrf.mxu0
  %453 = vmatprep.mubr.f32.mxu0 0.0
  %454 = vmatmul.mubr.f32.gmra.mxu0 %v360
  %v455 = vpop.f32.mrf.mxu0
  %v456 = vadd.f32 %v328, %v455
  %v457 = vpop.f32.mrf.mxu0
  %458 = vmatprep.mubr.f32.mxu0 0.0
  %459 = vmatmul.mubr.f32.gmra.mxu0 %v363
  %v460 = vpop.f32.mrf.mxu0
  %v461 = vadd.f32 %v333, %v460
  %v462 = vpop.f32.mrf.mxu0
  %463 = vmatprep.mubr.f32.mxu0 0.0
  %464 = vmatmul.mubr.f32.gmra.mxu0 %v366
  %v465 = vpop.f32.mrf.mxu0
  %v466 = vadd.f32 %v338, %v465
  %v467 = vpop.f32.mrf.mxu0
  %468 = vmatprep.mubr.f32.mxu0 0.0
  %469 = vmatmul.mubr.f32.gmra.mxu0 %v369
  %v470 = vpop.f32.mrf.mxu0
  %v471 = vadd.f32 %v343, %v470
  %v472 = vpop.f32.mrf.mxu0
  %473 = vmatprep.mubr.f32.mxu0 0.0
  %474 = vmatmul.mubr.f32.gmra.mxu0 %v372
  %v475 = vpop.f32.mrf.mxu0
  %v476 = vadd.f32 %v348, %v475
  %v477 = vpop.f32.mrf.mxu0
  %478 = vdwg.mxu0
  %v479 = vmax.f32 %v441, 0.0
  %v480 = vmax.f32 %v446, 0.0
  %v481 = vmax.f32 %v451, 0.0
  %v482 = vmax.f32 %v456, 0.0
  %v483 = vmax.f32 %v461, 0.0
  %v484 = vmax.f32 %v466, 0.0
  %v485 = vmax.f32 %v471, 0.0
  %v486 = vmax.f32 %v476, 0.0
  %v487 = vld [vmem:[%s7] sm:$0xff]
  %v488 = vld [vmem:[%s8] sm:$0xff]
  %490 = vset.pattern.permute.xlu0 0
  %491 = vperm.xlu0 %490, %v488
  %v492 = vpop.permute.xlu0 %491
  %vm494 = vcmask 523264
  %v496 = vsel %vm494, %v487, 0
  %498 = vmatprep.subr.mxu0 0.0
  %499 = vmatpush1.msra.mxu0 0.0
  %500 = vmatprep.subr.mxu0 0.0
  %501 = vmatpush1.msra.mxu0 0.0
  %502 = vmatprep.subr.mxu0 0.0
  %503 = vmatpush1.msra.mxu0 0.0
  %504 = vmatprep.subr.mxu0 0.0
  %505 = vmatpush1.msra.mxu0 0.0
  %506 = vmatprep.subr.mxu0 0.0
  %507 = vmatpush1.msra.mxu0 0.0
  %508 = vmatprep.subr.mxu0 0.0
  %509 = vmatpush1.msra.mxu0 0.0
  %510 = vmatprep.subr.mxu0 0.0
  %511 = vmatpush1.msra.mxu0 0.0
  %512 = vmatprep.subr.mxu0 0.0
  %513 = vmatpush1.msra.mxu0 0.0
  %514 = vmatprep.subr.mxu0 0.0
  %515 = vmatpush1.msra.mxu0 %v486
  %516 = vmatprep.subr.mxu0 0.0
  %517 = vmatpush1.msra.mxu0 %v485
  %518 = vmatprep.subr.mxu0 0.0
  %519 = vmatpush1.msra.mxu0 %v484
  %520 = vmatprep.subr.mxu0 0.0
  %521 = vmatpush1.msra.mxu0 %v483
  %522 = vmatprep.subr.mxu0 0.0
  %523 = vmatpush1.msra.mxu0 %v482
  %524 = vmatprep.subr.mxu0 0.0
  %525 = vmatpush1.msra.mxu0 %v481
  %526 = vmatprep.subr.mxu0 0.0
  %527 = vmatpush1.msra.mxu0 %v480
  %528 = vmatprep.subr.mxu0 0.0
  %529 = vmatpush1.msra.mxu0 %v479
  %530 = vmatprep.subr.mxu0 0.0
  %531 = vmatpush2.msra.mxu0 0.0
  %532 = vmatprep.subr.mxu0 0.0
  %533 = vmatpush2.msra.mxu0 0.0
  %534 = vmatprep.subr.mxu0 0.0
  %535 = vmatpush2.msra.mxu0 0.0
  %536 = vmatprep.subr.mxu0 0.0
  %537 = vmatpush2.msra.mxu0 0.0
  %538 = vmatprep.subr.mxu0 0.0
  %539 = vmatpush2.msra.mxu0 0.0
  %540 = vmatprep.subr.mxu0 0.0
  %541 = vmatpush2.msra.mxu0 0.0
  %542 = vmatprep.subr.mxu0 0.0
  %543 = vmatpush2.msra.mxu0 0.0
  %544 = vmatprep.subr.mxu0 0.0
  %545 = vmatpush2.msra.mxu0 0.0
  %546 = vmatprep.subr.mxu0 0.0
  %547 = vmatpush2.msra.mxu0 0.0
  %548 = vmatprep.subr.mxu0 0.0
  %549 = vmatpush2.msra.mxu0 0.0
  %550 = vmatprep.subr.mxu0 0.0
  %551 = vmatpush2.msra.mxu0 0.0
  %552 = vmatprep.subr.mxu0 0.0
  %553 = vmatpush2.msra.mxu0 0.0
  %554 = vmatprep.subr.mxu0 0.0
  %555 = vmatpush2.msra.mxu0 0.0
  %556 = vmatprep.subr.mxu0 0.0
  %557 = vmatpush2.msra.mxu0 0.0
  %558 = vmatprep.subr.mxu0 0.0
  %559 = vmatpush2.msra.mxu0 0.0
  %560 = vmatprep.subr.mxu0 0.0
  %561 = vmatpush2.msra.mxu0 0.0
  %562 = vmatprep.mubr.f32.mxu0 0.0
  %563 = vmatmul.mubr.f32.gmra.mxu0 %v496
  %v564 = vpop.f32.mrf.mxu0
  %v565 = vadd.f32 %v492, %v564
  %v566 = vpop.f32.mrf.mxu0
  %567 = vdwg.mxu0
  %568 = vst [vmem:[%s9] sm:$0xff] %v565
  // Predicated region
  $region38: #{dueling_dqn_forward.1} parent=0 // pred_check
    _
  $region39: #{dueling_dqn_forward.1} parent=0 // pred_check_branch
    %570 = sbr.rel (0) target = $region41
  $region40: #{dueling_dqn_forward.1} parent=0 // pred_region
    _
  $region41: #{dueling_dqn_forward.1} parent=0 // pred_fallthru
    _
  // Predicated region
  $region42: #{dueling_dqn_forward.1} parent=0 // pred_check
    _
  $region43: #{dueling_dqn_forward.1} parent=0 // pred_check_branch
    %572 = sbr.rel (0) target = $region45
  $region44: #{dueling_dqn_forward.1} parent=0 // pred_region
    _
  $region45: #{dueling_dqn_forward.1} parent=0 // pred_fallthru
    _

</llo_original>
